<compile_context>
chip_gen: v7x
topology: tpu7x:2x2x1
jax: 0.10.0
libtpu: 0.0.40
codegen_flags: <defaults>
</compile_context>

<pallas_src>
import functools
import math

import jax
import jax.numpy as jnp
from jax.experimental import pallas as pl
from jax.experimental.pallas import tpu as pltpu


def _round_up(x, m):
    return ((x + m - 1) // m) * m


def _cdiv(a, b):
    return (a + b - 1) // b


# ----------------------------------------------------------------------------
# Kernel 1: forward feature extraction  y = x @ W + b   (tiled MXU matmul)
#   x tile / W tile arrive as bf16 (cast on host), accumulate in f32.
# ----------------------------------------------------------------------------
def _feature_kernel(x_ref, w_ref, b_ref, o_ref, acc_ref):
    k = pl.program_id(2)

    @pl.when(k == 0)
    def _():
        acc_ref[...] = jnp.zeros_like(acc_ref)

    acc_ref[...] += jnp.dot(x_ref[...], w_ref[...],
                            preferred_element_type=jnp.float32)

    @pl.when(k == pl.num_programs(2) - 1)
    def _():
        # bias added once, after the K reduction is complete
        o_ref[...] = (acc_ref[...] + b_ref[...]).astype(o_ref.dtype)


def _forward_tiles(M, Hin, Hout, tm=512, tn=512, tk=512):
    """Pick matmul tiles; guarantee >=2 parallel (M,N) tiles when possible."""
    tk = min(tk, _round_up(Hin, 128))
    tn = min(tn, _round_up(Hout, 128))
    tm = min(tm, _round_up(M, 8))
    Np = _round_up(Hout, 128)
    if _cdiv(M, tm) * _cdiv(Np, tn) < 2:
        if M > 8:
            tm = _round_up(_cdiv(M, 2), 8)          # exactly 2 tiles along M
        elif Np > 128:
            tn = max(128, ((Np // 2) // 128) * 128)  # split along N instead
    return tm, tn, tk


def _feature_matmul(x2, w_p, b_p, M, Hin, Hout, tm, tn, tk):
    """x2: (M, Hin) f32, w_p: (Kp, Np) bf16 padded, b_p: (1, Np) f32 padded."""
    Kp, Np = w_p.shape
    Mp = _round_up(M, tm)

    # Host-side bf16 cast fused into padding (half the input DMA bytes).
    if (Mp, Kp) == (M, Hin):
        x_p = x2.astype(jnp.bfloat16)
    else:
        x_p = jnp.zeros((Mp, Kp), jnp.bfloat16).at[:M, :Hin].set(
            x2.astype(jnp.bfloat16))

    grid = (Mp // tm, Np // tn, Kp // tk)

    out = pl.pallas_call(
        _feature_kernel,
        out_shape=jax.ShapeDtypeStruct((Mp, Np), jnp.float32),
        grid=grid,
        in_specs=[
            pl.BlockSpec((tm, tk), lambda i, j, k: (i, k)),   # x (bf16)
            pl.BlockSpec((tk, tn), lambda i, j, k: (k, j)),   # W (bf16)
            pl.BlockSpec((1, tn), lambda i, j, k: (0, j)),    # b (f32)
        ],
        out_specs=pl.BlockSpec((tm, tn), lambda i, j, k: (i, j)),
        scratch_shapes=[pltpu.VMEM((tm, tn), jnp.float32)],
        compiler_params=pltpu.CompilerParams(
            dimension_semantics=("parallel", "parallel", "arbitrary"),
            vmem_limit_bytes=32 * 1024 * 1024),
    )(x_p, w_p, b_p)

    if (Mp, Np) != (M, Hout):
        out = out[:M, :Hout]
    return out


# ----------------------------------------------------------------------------
# Kernel 2: fused EMA step over the persistent parameter slab
#   ema_new = decay * ema + (1 - decay) * new     (f32, in-place on the slab)
# ----------------------------------------------------------------------------
def _ema_update_kernel(decay_ref, ema_ref, new_ref, out_ref):
    d = decay_ref[0]                      # scalar read from SMEM (no recompile)
    out_ref[...] = d * ema_ref[...] + (1.0 - d) * new_ref[...]


@functools.partial(jax.jit, static_argnames=("tr",), donate_argnums=(0,))
def _ema_step_slab(ema_slab, new_slab, decay_arr, *, tr):
    """One fused EMA update over the whole (rows_p, lanes) f32 slab, in place."""
    rows_p, lanes = ema_slab.shape
    return pl.pallas_call(
        _ema_update_kernel,
        out_shape=jax.ShapeDtypeStruct((rows_p, lanes), jnp.float32),
        grid=(rows_p // tr,),
        in_specs=[
            pl.BlockSpec(memory_space=pltpu.MemorySpace.SMEM),   # decay scalar
            pl.BlockSpec((tr, lanes), lambda i: (i, 0)),         # ema tile
            pl.BlockSpec((tr, lanes), lambda i: (i, 0)),         # new tile
        ],
        out_specs=pl.BlockSpec((tr, lanes), lambda i: (i, 0)),
        input_output_aliases={1: 0},   # update the persistent slab in place
        compiler_params=pltpu.CompilerParams(
            dimension_semantics=("parallel",),
            vmem_limit_bytes=32 * 1024 * 1024),
    )(decay_arr, ema_slab, new_slab)


# ----------------------------------------------------------------------------
# Python-side EMA wrapper (mirrors the nn.Module bookkeeping; glue only)
# ----------------------------------------------------------------------------
class EMAPallas:
    LANES = 512            # lane-dense slab width (multiple of 128)
    MAX_TILE_ROWS = 1024    # (1024, 512) f32 tile = 2 MiB per ref

    def __init__(self, model_params, ema_decay, skip_keys=None):
        # EMA master copy kept in f32 (decay=0.999 increments need f32).
        self.skip_keys = set(skip_keys or set())
        self.decay = float(ema_decay)
        self.num_updates = 0

        self._ema_keys = [k for k in model_params if k not in self.skip_keys]
        self._shapes = {k: tuple(jnp.asarray(v).shape) for k, v in model_params.items()}
        self._sizes = {k: int(math.prod(self._shapes[k]) or 1) for k in model_params}

        # Skip-keys are kept as plain arrays (assigned, never averaged).
        self.skip_params = {k: jnp.asarray(model_params[k], jnp.float32)
                            for k in model_params if k in self.skip_keys}

        # Offsets into the flattened slab for each averaged parameter.
        self._offsets = {}
        off = 0
        for k in self._ema_keys:
            self._offsets[k] = off
            off += self._sizes[k]
        self._n_total = off

        # Slab geometry: lane-dense, small padding, >=2 grid tiles (v7x megacore).
        lanes = self.LANES
        if self._n_total > 0:
            rows = _cdiv(self._n_total, lanes)
            grid_n = max(2, _cdiv(rows, self.MAX_TILE_ROWS))
            self._tr = _round_up(_cdiv(rows, grid_n), 8)
            self._rows_p = self._tr * grid_n
            slab_elems = self._rows_p * lanes
            flat = jnp.concatenate(
                [jnp.ravel(jnp.asarray(model_params[k], jnp.float32))
                 for k in self._ema_keys])
            self.ema_slab = jnp.pad(
                flat, (0, slab_elems - self._n_total)).reshape(self._rows_p, lanes)
        else:
            self._tr = 8
            self._rows_p = 0
            self.ema_slab = None

        # Forward-path weight cache (padded bf16 W, padded f32 b), rebuilt per step.
        self._wcache = {}

    # -- slab access ---------------------------------------------------------
    def _get_param(self, key):
        if key in self.skip_keys:
            return self.skip_params[key]
        off, sz = self._offsets[key], self._sizes[key]
        return self.ema_slab.reshape(-1)[off:off + sz].reshape(self._shapes[key])

    def _get_padded_weights(self, tk, tn):
        cache_key = (tk, tn)
        if cache_key not in self._wcache:
            w = self._get_param("w").astype(jnp.float32)
            b = self._get_param("b").astype(jnp.float32)
            Hin, Hout = w.shape
            Kp = _round_up(Hin, tk)
            Np = _round_up(Hout, tn)
            w_bf16 = w.astype(jnp.bfloat16)
            if (Kp, Np) != (Hin, Hout):
                w_p = jnp.zeros((Kp, Np), jnp.bfloat16).at[:Hin, :Hout].set(w_bf16)
            else:
                w_p = w_bf16
            b2 = b.reshape(1, Hout)
            if Np != Hout:
                b_p = jnp.zeros((1, Np), jnp.float32).at[:, :Hout].set(b2)
            else:
                b_p = b2
            self._wcache[cache_key] = (w_p, b_p)
        return self._wcache[cache_key]

    # -- module API ----------------------------------------------------------
    def forward(self, x):
        Hin, Hout = self._shapes["w"]
        B, S, _ = x.shape
        M = B * S
        tm, tn, tk = _forward_tiles(M, Hin, Hout)
        w_p, b_p = self._get_padded_weights(tk, tn)
        y = _feature_matmul(x.reshape(M, Hin).astype(jnp.float32),
                            w_p, b_p, M, Hin, Hout, tm, tn, tk)
        return y.reshape(B, S, Hout)

    def step(self, new_params):
        """One EMA step: single fused Pallas kernel over all non-skip params."""
        if self._n_total > 0:
            new_flat = jnp.concatenate(
                [jnp.ravel(jnp.asarray(new_params[k], jnp.float32))
                 for k in self._ema_keys])
            pad = self._rows_p * self.LANES - self._n_total
            new_slab = jnp.pad(new_flat, (0, pad)).reshape(self._rows_p, self.LANES)
            decay_arr = jnp.asarray([self.decay], dtype=jnp.float32)
            self.ema_slab = _ema_step_slab(self.ema_slab, new_slab, decay_arr,
                                           tr=self._tr)
        for k in self.skip_keys:
            if k in new_params:
                self.skip_params[k] = jnp.asarray(new_params[k], jnp.float32)
        self._wcache = {}            # weights changed -> rebuild forward cache lazily
        self.num_updates += 1

    def restore(self):
        """Return the EMA parameter dict (counterpart of load_state_dict glue)."""
        out = {k: self._get_param(k) for k in self._ema_keys}
        out.update(self.skip_params)
        return out

    @staticmethod
    def get_annealed_rate(start, end, curr_step, total_steps):
        r = end - start
        pct_remaining = 1 - curr_step / total_steps
        return end - r * pct_remaining


# ----------------------------------------------------------------------------
if __name__ == "__main__":
    key = jax.random.PRNGKey(0)
    kx, kw, kb, kw2, kb2, kw3, kb3 = jax.random.split(key, 7)

    B, S, H = 2, 8, 32  # (batch, seq, hidden) toy shapes

    x = jax.random.normal(kx, (B, S, H), dtype=jnp.float32)

    online_params = {
        "w": jax.random.normal(kw, (H, H), dtype=jnp.float32) * 0.02,
        "b": jax.random.normal(kb, (1, H), dtype=jnp.float32) * 0.01,
    }

    ema = EMAPallas(online_params, ema_decay=0.999)

    # forward through the EMA copy (tiled Pallas MXU kernel)
    y0 = ema.forward(x)
    jax.block_until_ready(y0)

    # step 1: simulate an updated online model, take one EMA step (fused kernel)
    params_1 = {
        "w": online_params["w"] + 0.1 * jax.random.normal(kw2, (H, H), jnp.float32),
        "b": online_params["b"] + 0.1 * jax.random.normal(kb2, (1, H), jnp.float32),
    }
    ema.step(params_1)

    ref_w = 0.999 * online_params["w"] + 0.001 * params_1["w"]
    ref_b = 0.999 * online_params["b"] + 0.001 * params_1["b"]
    p = ema.restore()
    assert jnp.allclose(p["w"], ref_w, atol=1e-6, rtol=1e-6), "EMA w mismatch (step 1)"
    assert jnp.allclose(p["b"], ref_b, atol=1e-6, rtol=1e-6), "EMA b mismatch (step 1)"

    # step 2: annealed decay (SMEM scalar -> no recompile), update again
    d2 = EMAPallas.get_annealed_rate(0.999, 0.9999, curr_step=1, total_steps=10)
    ema.decay = d2
    params_2 = {
        "w": params_1["w"] + 0.1 * jax.random.normal(kw3, (H, H), jnp.float32),
        "b": params_1["b"] + 0.1 * jax.random.normal(kb3, (1, H), jnp.float32),
    }
    ema.step(params_2)

    d2f = float(d2)
    ref_w = d2f * ref_w + (1.0 - d2f) * params_2["w"]
    ref_b = d2f * ref_b + (1.0 - d2f) * params_2["b"]
    p = ema.restore()
    assert jnp.allclose(p["w"], ref_w, atol=1e-6, rtol=1e-6), "EMA w mismatch (step 2)"
    assert jnp.allclose(p["b"], ref_b, atol=1e-6, rtol=1e-6), "EMA b mismatch (step 2)"

    # forward again with averaged weights
    y1 = ema.forward(x)
    jax.block_until_ready(y1)

    # forward reference with the same bf16 MXU inputs / f32 accumulation
    ema_w = p["w"]
    ema_b = p["b"]
    ref_y1_bf16 = jnp.dot(
        x.reshape(B * S, H).astype(jnp.bfloat16),
        ema_w.astype(jnp.bfloat16),
        preferred_element_type=jnp.float32) + ema_b
    assert jnp.allclose(y1.reshape(B * S, H), ref_y1_bf16, atol=2e-3), \
        "forward mismatch (bf16 ref)"

    # loose check against the full-f32 reference (bf16 input rounding only)
    ref_y1_f32 = x.reshape(B * S, H) @ ema_w + ema_b
    assert jnp.allclose(y1.reshape(B * S, H), ref_y1_f32, atol=5e-2), \
        "forward mismatch (f32 ref)"

    assert y0.shape == (B, S, H) and y1.shape == (B, S, H)
    assert ema.num_updates == 2

    print("KERNEL_OK")
</pallas_src>

<mosaic_0001>
module attributes {stable_mosaic.version = 11 : i64} {
  func.func @_feature_kernel(%arg0: i32, %arg1: i32, %arg2: i32, %arg3: memref<8x128xbf16, #tpu.memory_space<vmem>>, %arg4: memref<128x128xbf16, #tpu.memory_space<vmem>>, %arg5: memref<1x128xf32, #tpu.memory_space<vmem>>, %arg6: memref<8x128xf32, #tpu.memory_space<vmem>>, %arg7: memref<8x128xf32, #tpu.memory_space<vmem>>) attributes {dimension_semantics = [#tpu.dimension_semantics<parallel>, #tpu.dimension_semantics<parallel>, #tpu.dimension_semantics<arbitrary>], iteration_bounds = array<i64: 2, 1, 1>, scalar_prefetch = 0 : i64, scratch_operands = 1 : i64, tpu.core_type = #tpu.core_type<tc>, window_params = [{transform_indices = @transform_0, window_bounds = array<i64: 8, 128>}, {transform_indices = @transform_1, window_bounds = array<i64: 128, 128>}, {transform_indices = @transform_2, window_bounds = array<i64: 1, 128>}, {transform_indices = @transform_3, window_bounds = array<i64: 8, 128>}]} {
    %c0_i32 = arith.constant 0 : i32
    %0 = arith.cmpi eq, %arg2, %c0_i32 : i32
    %1 = arith.extui %0 : i1 to i32
    %c0_i32_0 = arith.constant 0 : i32
    %2 = arith.cmpi ne, %1, %c0_i32_0 : i32
    scf.if %2 {
      %cst_10 = arith.constant 0.000000e+00 : f32
      %12 = vector.broadcast %cst_10 : f32 to vector<8x128xf32>
      %c0_11 = arith.constant 0 : index
      %c0_12 = arith.constant 0 : index
      %13 = vector.load %arg7[%c0_11, %c0_12] : memref<8x128xf32, #tpu.memory_space<vmem>>, vector<8x128xf32>
      tpu.vector_store %arg7[%c0_11, %c0_12], %12 {strides = array<i32>} : memref<8x128xf32, #tpu.memory_space<vmem>>, vector<8x128xf32>,
    } else {
    }
    %c0 = arith.constant 0 : index
    %c0_1 = arith.constant 0 : index
    %3 = vector.load %arg7[%c0, %c0_1] : memref<8x128xf32, #tpu.memory_space<vmem>>, vector<8x128xf32>
    %c0_2 = arith.constant 0 : index
    %c0_3 = arith.constant 0 : index
    %4 = vector.load %arg3[%c0_2, %c0_3] : memref<8x128xbf16, #tpu.memory_space<vmem>>, vector<8x128xbf16>
    %c0_4 = arith.constant 0 : index
    %c0_5 = arith.constant 0 : index
    %5 = vector.load %arg4[%c0_4, %c0_5] : memref<128x128xbf16, #tpu.memory_space<vmem>>, vector<128x128xbf16>
    %cst = arith.constant dense<0.000000e+00> : vector<8x128xf32>
    %6 = tpu.matmul %4, %5, %cst {dimension_numbers = #tpu.dot_dimension_numbers<[1], [0], [0], [1], [0, 0, 1, 1], [], []>} : vector<8x128xbf16>, vector<128x128xbf16>, vector<8x128xf32> -> vector<8x128xf32>
    %7 = arith.addf %3, %6 : vector<8x128xf32>
    %c0_6 = arith.constant 0 : index
    %c0_7 = arith.constant 0 : index
    %8 = vector.load %arg7[%c0_6, %c0_7] : memref<8x128xf32, #tpu.memory_space<vmem>>, vector<8x128xf32>
    tpu.vector_store %arg7[%c0_6, %c0_7], %7 {strides = array<i32>} : memref<8x128xf32, #tpu.memory_space<vmem>>, vector<8x128xf32>,
    %c0_i32_8 = arith.constant 0 : i32
    %9 = arith.cmpi eq, %arg2, %c0_i32_8 : i32
    %10 = arith.extui %9 : i1 to i32
    %c0_i32_9 = arith.constant 0 : i32
    %11 = arith.cmpi ne, %10, %c0_i32_9 : i32
    scf.if %11 {
      %c0_10 = arith.constant 0 : index
      %c0_11 = arith.constant 0 : index
      %12 = vector.load %arg7[%c0_10, %c0_11] : memref<8x128xf32, #tpu.memory_space<vmem>>, vector<8x128xf32>
      %c0_12 = arith.constant 0 : index
      %c0_13 = arith.constant 0 : index
      %13 = vector.load %arg5[%c0_12, %c0_13] : memref<1x128xf32, #tpu.memory_space<vmem>>, vector<1x128xf32>
      %14 = vector.broadcast %13 : vector<1x128xf32> to vector<8x128xf32>
      %15 = arith.addf %12, %14 : vector<8x128xf32>
      %c0_14 = arith.constant 0 : index
      %c0_15 = arith.constant 0 : index
      %16 = vector.load %arg6[%c0_14, %c0_15] : memref<8x128xf32, #tpu.memory_space<vmem>>, vector<8x128xf32>
      tpu.vector_store %arg6[%c0_14, %c0_15], %15 {strides = array<i32>} : memref<8x128xf32, #tpu.memory_space<vmem>>, vector<8x128xf32>,
    } else {
    }
    return
  }
  func.func @transform_0(%arg0: i32, %arg1: i32, %arg2: i32) -> (i32, i32) {
    %c0_i32 = arith.constant 0 : i32
    return %arg0, %arg2 : i32, i32
  }
  func.func @transform_1(%arg0: i32, %arg1: i32, %arg2: i32) -> (i32, i32) {
    %c0_i32 = arith.constant 0 : i32
    return %arg2, %arg1 : i32, i32
  }
  func.func @transform_2(%arg0: i32, %arg1: i32, %arg2: i32) -> (i32, i32) {
    %c0_i32 = arith.constant 0 : i32
    %c0_i32_0 = arith.constant 0 : i32
    return %c0_i32, %arg1 : i32, i32
  }
  func.func @transform_3(%arg0: i32, %arg1: i32, %arg2: i32) -> (i32, i32) {
    %c0_i32 = arith.constant 0 : i32
    return %arg0, %arg1 : i32, i32
  }
}

</mosaic_0001>

<llo_original>
// kernel: tpu_custom_call.1
$region0: #{tpu_custom_call.1}
  #allocation0 [shape = 'u32[]', space=smem, size = 0x4, offset = 0x4, fixed_abs, tag = 'smem constant byte address 0x4 - core index']
  #allocation1 [shape = 'u32[144,128]{1,0:T(1,128)}', space=vmem, size = 0x12000, scoped, tag = 'internal scratch']
  #allocation2 [shape = 'f32[8,128]{1,0:T(8,128)}', space=vmem, size = 0x1000, scoped, tag = 'scratch operand']
  %s0 = inlined_call_operand.hbm [shape: bf16[16,128], index: 0, kind: input, shape index: {}]
  %s1 = inlined_call_operand.hbm [shape: bf16[128,128], index: 1, kind: input, shape index: {}]
  %s2 = inlined_call_operand.vmem [shape: f32[1,128], index: 2, kind: input, shape index: {}]
  %s3 = inlined_call_operand.hbm [shape: f32[16,128], index: 3, kind: output, shape index: {}]
  %s4 = sld [smem:[#allocation0]]
  $region61: #{tpu_custom_call.1} parent=0
    _
  %s6 = ssub.s32 1, %s4
  %s7 = scalar_select 0, %s6, %s4
  $region1: #{tpu_custom_call.1} parent=0
    #allocation3 [shape = 'u8[4096]{0}', space=vmem, size = 0x1000, scoped, tag = 'input window, operand 0']
    #allocation4 [shape = 's32[2]{0}', space=sflag, size = 0x8, scoped, tag = 'scoped memory for tpu_custom_call.1']
    #allocation5 [shape = 's32[2]{0}', space=sflag, size = 0x8, scoped, tag = 'scoped memory for tpu_custom_call.1']
    #allocation6 [shape = 'u8[32768]{0}', space=vmem, size = 0x8000, scoped, tag = 'input window, operand 1, single buffered']
    #allocation7 [shape = 's32[1]{0}', space=sflag, size = 0x4, scoped, tag = 'scoped memory for tpu_custom_call.1']
    #allocation8 [shape = 'u8[8192]{0}', space=vmem, size = 0x2000, scoped, tag = 'output window, operand 0']
    %8 = vsyncpa [#allocation4], 0
    %s9 = scalar_lea.sflag [#allocation4], 1
    %10 = vsyncpa %s9, 0
    %11 = vsyncpa [#allocation7], 0
    %12 = vsyncpa [#allocation5], 0
    %s13 = scalar_lea.sflag [#allocation5], 1
    %14 = vsyncpa %s13, 0
    loop: start=0, step=1, limit=4
    $region2: #{tpu_custom_call.1} parent=1 // loop_pre_header
      _
    $region3: #{tpu_custom_call.1} parent=1 // loop_header
      %s16 = sphi 0, %s20
      %p17 = scmp.ge.s32.totalorder %s16, 4
      %s23 = sphi 0, %s42
      %s24 = sphi 0, %s38
      %s25 = sphi 0, %s34
      %s26 = sphi 0, %s23
      %s27 = sphi 0, %s24
      %s28 = sphi 0, %s25
      %s29 = sphi 0, %s26
      %s30 = sphi 0, %s27
      %s31 = sphi 0, %s28
      %s47 = sphi 0, %s49
      %s50 = sphi 0, %s47
      %s51 = sphi 0, %s50
      %s67 = sphi 0, %s51
      %s75 = sphi 0, %s77
      %s78 = sphi 0, %s75
      %s79 = sphi 0, %s78
      %s95 = sphi 0, %s79
      %s101 = sphi 0, %s103
      %s104 = sphi 0, %s101
      %s105 = sphi 0, %s104
      %s121 = sphi 0, %s105
      %s129 = sphi 0, %s131
      %s132 = sphi 0, %s129
      %s133 = sphi 0, %s132
      %s149 = sphi 0, %s133
    $region4: #{tpu_custom_call.1} parent=1 // loop_header_branch
      %19 = sbr.rel (%p17) target = $region8
    $region5: #{tpu_custom_call.1} parent=1 // loop_body
      %s21 = ssub.s32 %s16, 1
      %s22 = ssub.s32 %s16, 2
      %s32 = sadd.s32 1, %s25
      %p33 = scmp.ge.s32.totalorder %s32, 1
      %s34 = scalar_select %p33, 0, %s32
      %s35 = sadd.s32 1, %s24
      %s36 = scalar_select %p33, %s35, %s24
      %p37 = scmp.ge.s32.totalorder %s36, 1
      %s38 = scalar_select %p37, 0, %s36
      %s39 = sadd.s32 1, %s23
      %s40 = scalar_select %p37, %s39, %s23
      %p41 = scmp.ge.s32.totalorder %s40, 2
      %s42 = scalar_select %p41, 0, %s40
      %s43 = ssub.s32 %s23, %s42
      %s44 = ssub.s32 %s25, %s34
      %s45 = sor.u32 %s43, %s44
      %p46 = scmp.eq.s32.totalorder %s45, 0
      %s48 = sadd.s32 %s47, 1
      %s49 = scalar_select %p46, %s47, %s48
      %p52 = pneg %p46
      %p53 = scmp.eq.s32.totalorder %s16, 1
      %p54 = por %p52, %p53
      %p55 = scmp.ne.s32.totalorder %s47, %s50
      %p56 = scmp.eq.s32.totalorder %s16, 0
      %p57 = por %p55, %p56
      %p58 = scmp.ne.s32.totalorder %s47, %s50
      %p59 = scmp.eq.s32.totalorder %s21, 1
      %p60 = por %p58, %p59
      %p61 = scmp.ne.s32.totalorder %s50, %s51
      %p62 = scmp.eq.s32.totalorder %s21, 0
      %p63 = por %p61, %p62
      %p64 = scmp.ne.s32.totalorder %s50, %s51
      %p65 = scmp.eq.s32.totalorder %s22, 1
      %p66 = por %p64, %p65
      %p68 = scmp.ne.s32.totalorder %s51, %s67
      %p69 = scmp.eq.s32.totalorder %s22, 0
      %p70 = por %p68, %p69
      %s71 = ssub.s32 %s25, %s34
      %s72 = ssub.s32 %s24, %s38
      %s73 = sor.u32 %s71, %s72
      %p74 = scmp.eq.s32.totalorder %s73, 0
      %s76 = sadd.s32 %s75, 1
      %s77 = scalar_select %p74, %s75, %s76
      %p80 = pneg %p74
      %p81 = scmp.eq.s32.totalorder %s16, 1
      %p82 = por %p80, %p81
      %p83 = scmp.ne.s32.totalorder %s75, %s78
      %p84 = scmp.eq.s32.totalorder %s16, 0
      %p85 = por %p83, %p84
      %p86 = scmp.ne.s32.totalorder %s75, %s78
      %p87 = scmp.eq.s32.totalorder %s21, 1
      %p88 = por %p86, %p87
      %p89 = scmp.ne.s32.totalorder %s78, %s79
      %p90 = scmp.eq.s32.totalorder %s21, 0
      %p91 = por %p89, %p90
      %p92 = scmp.ne.s32.totalorder %s78, %s79
      %p93 = scmp.eq.s32.totalorder %s22, 1
      %p94 = por %p92, %p93
      %p96 = scmp.ne.s32.totalorder %s79, %s95
      %p97 = scmp.eq.s32.totalorder %s22, 0
      %p98 = por %p96, %p97
      %s99 = ssub.s32 %s24, %s38
      %p100 = scmp.eq.s32.totalorder %s99, 0
      %s102 = sadd.s32 %s101, 1
      %s103 = scalar_select %p100, %s101, %s102
      %p106 = pneg %p100
      %p107 = scmp.eq.s32.totalorder %s16, 1
      %p108 = por %p106, %p107
      %p109 = scmp.ne.s32.totalorder %s101, %s104
      %p110 = scmp.eq.s32.totalorder %s16, 0
      %p111 = por %p109, %p110
      %p112 = scmp.ne.s32.totalorder %s101, %s104
      %p113 = scmp.eq.s32.totalorder %s21, 1
      %p114 = por %p112, %p113
      %p115 = scmp.ne.s32.totalorder %s104, %s105
      %p116 = scmp.eq.s32.totalorder %s21, 0
      %p117 = por %p115, %p116
      %p118 = scmp.ne.s32.totalorder %s104, %s105
      %p119 = scmp.eq.s32.totalorder %s22, 1
      %p120 = por %p118, %p119
      %p122 = scmp.ne.s32.totalorder %s105, %s121
      %p123 = scmp.eq.s32.totalorder %s22, 0
      %p124 = por %p122, %p123
      %s125 = ssub.s32 %s23, %s42
      %s126 = ssub.s32 %s24, %s38
      %s127 = sor.u32 %s125, %s126
      %p128 = scmp.eq.s32.totalorder %s127, 0
      %s130 = sadd.s32 %s129, 1
      %s131 = scalar_select %p128, %s129, %s130
      %p134 = pneg %p128
      %p135 = scmp.eq.s32.totalorder %s16, 1
      %p136 = por %p134, %p135
      %p137 = scmp.ne.s32.totalorder %s129, %s132
      %p138 = scmp.eq.s32.totalorder %s16, 0
      %p139 = por %p137, %p138
      %p140 = scmp.ne.s32.totalorder %s129, %s132
      %p141 = scmp.eq.s32.totalorder %s21, 1
      %p142 = por %p140, %p141
      %p143 = scmp.ne.s32.totalorder %s132, %s133
      %p144 = scmp.eq.s32.totalorder %s21, 0
      %p145 = por %p143, %p144
      %p146 = scmp.ne.s32.totalorder %s132, %s133
      %p147 = scmp.eq.s32.totalorder %s22, 1
      %p148 = por %p146, %p147
      %p150 = scmp.ne.s32.totalorder %s133, %s149
      %p151 = scmp.eq.s32.totalorder %s22, 0
      %p152 = por %p150, %p151
      %p153 = scmp.le.s32.totalorder 1, %s16
      %p154 = scmp.lt.s32.totalorder %s16, 3
      %p155 = pnand %p153, %p154
      %p156 = pneg %p155
      // Predicated region
      $region9: #{tpu_custom_call.1} parent=5 // pred_check
        _
      $region10: #{tpu_custom_call.1} parent=5 // pred_check_branch
        %158 = sbr.rel (%p155) target = $region12
      $region11: #{tpu_custom_call.1} parent=5 // pred_region
        %s159 = ssub.s32 %s16, 1
        // Predicated region
        $region13: #{tpu_custom_call.1} parent=11 // pred_check
          %p160 = pneg %p91
        $region14: #{tpu_custom_call.1} parent=11 // pred_check_branch
          %162 = sbr.rel (%p160) target = $region16
        $region15: #{tpu_custom_call.1} parent=11 // pred_region
          %s163 = smul.u32 16, %s28
          %s165 = ssub.s32 1024, 1024
          %166 = vsyncadd [#allocation7], %s165
          %s167 = sadd.s32 %s27, %s163
          %s168 = smul.addr %s167, 64
          %s169 = scalar_lea.hbm %s1, %s168
          %s170 = sshll.u32 [#allocation6], 4
          %s171 = int_to_ptr.vmem [resolvable:$true] %s170
          %176 = dma.hbm_to_vmem [thread:$0]  %s169, 1024, %s171, [#allocation7], 64, 64, 4
        $region16: #{tpu_custom_call.1} parent=11 // pred_fallthru
          _
        // Predicated region
        $region17: #{tpu_custom_call.1} parent=11 // pred_check
          %p177 = pneg %p117
        $region18: #{tpu_custom_call.1} parent=11 // pred_check_branch
          %179 = sbr.rel (%p177) target = $region20
        $region19: #{tpu_custom_call.1} parent=11 // pred_region
          %p180 = scmp.lt.s32.totalorder %s27, 0
          %s181 = scalar_select %p180, %s27, 0
          %s182 = scalar_lea.vmem %s2, %s181
        $region20: #{tpu_custom_call.1} parent=11 // pred_fallthru
          _
      $region12: #{tpu_custom_call.1} parent=5 // pred_fallthru
        _
      %p183 = scmp.lt.s32.totalorder %s16, 2
      // Predicated region
      $region21: #{tpu_custom_call.1} parent=5 // pred_check
        %p184 = pneg %p183
      $region22: #{tpu_custom_call.1} parent=5 // pred_check_branch
        %186 = sbr.rel (%p184) target = $region24
      $region23: #{tpu_custom_call.1} parent=5 // pred_region
        // Predicated region
        $region25: #{tpu_custom_call.1} parent=23 // pred_check
          %p187 = pneg %p57
        $region26: #{tpu_custom_call.1} parent=23 // pred_check_branch
          %189 = sbr.rel (%p187) target = $region28
        $region27: #{tpu_custom_call.1} parent=23 // pred_region
          %s190 = sand.u32 %s47, 1
          %s191 = scalar_lea.sflag [#allocation4], %s190
          %s192 = sand.u32 %s47, 1
          %s193 = smul.addr %s192, 4
          %s194 = scalar_lea.vmem [#allocation3], %s193
          %s196 = ssub.s32 64, 64
          %197 = vsyncadd %s191, %s196
          %s198 = sadd.s32 %s25, %s23
          %s199 = smul.addr %s198, 64
          %s200 = scalar_lea.hbm %s0, %s199
          %s202 = sshll.u32 %s194, 4
          %s203 = int_to_ptr.vmem [resolvable:$true] %s202
          %205 = dma.hbm_to_vmem [thread:$0]  %s200, 64, %s203, %s191
        $region28: #{tpu_custom_call.1} parent=23 // pred_fallthru
          _
      $region24: #{tpu_custom_call.1} parent=5 // pred_fallthru
        _
      %p206 = scmp.le.s32.totalorder 1, %s16
      %p207 = scmp.lt.s32.totalorder %s16, 3
      %p208 = pnand %p206, %p207
      %p209 = pneg %p208
      // Predicated region
      $region29: #{tpu_custom_call.1} parent=5 // pred_check
        _
      $region30: #{tpu_custom_call.1} parent=5 // pred_check_branch
        %211 = sbr.rel (%p208) target = $region32
      $region31: #{tpu_custom_call.1} parent=5 // pred_region
        %s212 = ssub.s32 %s16, 1
        %s213 = sand.u32 %s50, 1
        %s214 = scalar_lea.sflag [#allocation4], %s213
        %s215 = sand.u32 %s50, 1
        %s216 = smul.addr %s215, 4
        %s217 = scalar_lea.vmem [#allocation3], %s216
        // Predicated region
        $region33: #{tpu_custom_call.1} parent=31 // pred_check
          %p218 = pneg %p63
        $region34: #{tpu_custom_call.1} parent=31 // pred_check_branch
          %220 = sbr.rel (%p218) target = $region36
        $region35: #{tpu_custom_call.1} parent=31 // pred_region
          %221 = dma.done %s214, 64
        $region36: #{tpu_custom_call.1} parent=31 // pred_fallthru
          _
        // Predicated region
        $region37: #{tpu_custom_call.1} parent=31 // pred_check
          %p222 = pneg %p91
        $region38: #{tpu_custom_call.1} parent=31 // pred_check_branch
          %224 = sbr.rel (%p222) target = $region40
        $region39: #{tpu_custom_call.1} parent=31 // pred_region
          %225 = dma.done [#allocation7], 1024
        $region40: #{tpu_custom_call.1} parent=31 // pred_fallthru
          _
        %s226 = sand.u32 %s50, 1
        %s227 = scalar_lea.sflag [#allocation4], %s226
        %s228 = sand.u32 %s50, 1
        %s229 = smul.addr %s228, 4
        %s230 = scalar_lea.vmem [#allocation3], %s229
        %p231 = pneg %p63
        %p232 = pneg %p60
        %p233 = pneg %p91
        %p234 = pneg %p88
        %p235 = scmp.lt.s32.totalorder %s27, 0
        %s236 = scalar_select %p235, %s27, 0
        %s237 = scalar_lea.vmem %s2, %s236
        %p238 = pneg %p117
        %p239 = pneg %p114
        %p240 = pneg %p145
        %p241 = pneg %p142
        %s242 = sand.u32 %s132, 1
        %s243 = scalar_lea.sflag [#allocation5], %s242
        %s244 = sand.u32 %s132, 1
        %s245 = smul.addr %s244, 8
        %s246 = scalar_lea.vmem [#allocation8], %s245
        %s247 = smul.u32 16, %s28
        %p248 = scmp.lt.s32.totalorder %s27, 0
        %s249 = scalar_select %p248, %s27, 0
        %s250 = scalar_lea.vmem %s2, %s249
        %p252 = scmp.eq.s32.totalorder %s28, 0
        // Predicated region
        $region41: #{tpu_custom_call.1} parent=31 // pred_check
          %p253 = pneg %p252
        $region42: #{tpu_custom_call.1} parent=31 // pred_check_branch
          %255 = sbr.rel (%p253) target = $region44
        $region43: #{tpu_custom_call.1} parent=31 // pred_region
          %256 = vst [vmem:[#allocation2] sm:$0xff] 0.0
        $region44: #{tpu_custom_call.1} parent=31 // pred_fallthru
          _
        %v257 = vld [vmem:[#allocation2] sm:$0xff]
        %v258 = vld [vmem:[%s217] sm:$0xf]
        %v259 = vld [vmem:[#allocation6] sm:$0xf]
        %v260 = vld [vmem:[#allocation6 + $0x4] sm:$0xf]
        %v261 = vld [vmem:[#allocation6 + $0x8] sm:$0xf]
        %v262 = vld [vmem:[#allocation6 + $0xc] sm:$0xf]
        %v263 = vld [vmem:[#allocation6 + $0x10] sm:$0xf]
        %v264 = vld [vmem:[#allocation6 + $0x14] sm:$0xf]
        %v265 = vld [vmem:[#allocation6 + $0x18] sm:$0xf]
        %v266 = vld [vmem:[#allocation6 + $0x1c] sm:$0xf]
        %v267 = vld [vmem:[#allocation6 + $0x20] sm:$0xf]
        %v268 = vld [vmem:[#allocation6 + $0x24] sm:$0xf]
        %v269 = vld [vmem:[#allocation6 + $0x28] sm:$0xf]
        %v270 = vld [vmem:[#allocation6 + $0x2c] sm:$0xf]
        %v271 = vld [vmem:[#allocation6 + $0x30] sm:$0xf]
        %v272 = vld [vmem:[#allocation6 + $0x34] sm:$0xf]
        %v273 = vld [vmem:[#allocation6 + $0x38] sm:$0xf]
        %v274 = vld [vmem:[#allocation6 + $0x3c] sm:$0xf]
        %v291 = vunpack.c.l.b16 %v259
        %v292 = vunpack.c.l.b16 %v260
        %v293 = vunpack.c.l.b16 %v261
        %v294 = vunpack.c.l.b16 %v262
        %v295 = vunpack.c.l.b16 %v263
        %v296 = vunpack.c.l.b16 %v264
        %v297 = vunpack.c.l.b16 %v265
        %v298 = vunpack.c.l.b16 %v266
        %v299 = vunpack.c.l.b16 %v267
        %v300 = vunpack.c.l.b16 %v268
        %v301 = vunpack.c.l.b16 %v269
        %v302 = vunpack.c.l.b16 %v270
        %v303 = vunpack.c.l.b16 %v271
        %v304 = vunpack.c.l.b16 %v272
        %v305 = vunpack.c.l.b16 %v273
        %v306 = vunpack.c.l.b16 %v274
        %v307 = vpack.c.b16 %v292, %v291
        %v308 = vpack.c.b16 %v294, %v293
        %v309 = vpack.c.b16 %v296, %v295
        %v310 = vpack.c.b16 %v298, %v297
        %v311 = vpack.c.b16 %v300, %v299
        %v312 = vpack.c.b16 %v302, %v301
        %v313 = vpack.c.b16 %v304, %v303
        %v314 = vpack.c.b16 %v306, %v305
        %323 = vmatprep.subr.bf16.mxu0 0
        %324 = vmatpush1.bf16.msra.mxu0 %v307
        %325 = vmatprep.subr.bf16.mxu0 0
        %326 = vmatpush1.bf16.msra.mxu0 %v308
        %327 = vmatprep.subr.bf16.mxu0 0
        %328 = vmatpush1.bf16.msra.mxu0 %v309
        %329 = vmatprep.subr.bf16.mxu0 0
        %330 = vmatpush1.bf16.msra.mxu0 %v310
        %331 = vmatprep.subr.bf16.mxu0 0
        %332 = vmatpush1.bf16.msra.mxu0 %v311
        %333 = vmatprep.subr.bf16.mxu0 0
        %334 = vmatpush1.bf16.msra.mxu0 %v312
        %335 = vmatprep.subr.bf16.mxu0 0
        %336 = vmatpush1.bf16.msra.mxu0 %v313
        %337 = vmatprep.subr.bf16.mxu0 0
        %338 = vmatpush1.bf16.msra.mxu0 %v314
        %339 = vmatprep.subr.bf16.mxu0 0
        %340 = vmatpush1.bf16.msra.mxu0 0
        %341 = vmatprep.subr.bf16.mxu0 0
        %342 = vmatpush1.bf16.msra.mxu0 0
        %343 = vmatprep.subr.bf16.mxu0 0
        %344 = vmatpush1.bf16.msra.mxu0 0
        %345 = vmatprep.subr.bf16.mxu0 0
        %346 = vmatpush1.bf16.msra.mxu0 0
        %347 = vmatprep.subr.bf16.mxu0 0
        %348 = vmatpush1.bf16.msra.mxu0 0
        %349 = vmatprep.subr.bf16.mxu0 0
        %350 = vmatpush1.bf16.msra.mxu0 0
        %351 = vmatprep.subr.bf16.mxu0 0
        %352 = vmatpush1.bf16.msra.mxu0 0
        %353 = vmatprep.subr.bf16.mxu0 0
        %354 = vmatpush1.bf16.msra.mxu0 0
        %355 = vmatprep.mubr.bf16.mxu0 0
        %356 = vmatmul.mubr.bf16.gmra.mrb[0].mxu0 %v258
        %v357 = vpop.f32.mrb[0].mxu0
        %v358 = vadd.f32 0.0, %v357
        %v359 = vpop.f32.mrb[0].mxu0
        %v360 = vpop.f32.mrb[0].mxu0
        %v361 = vpop.f32.mrb[0].mxu0
        %362 = vdwg.mxu0
        %v363 = vadd.f32 %v257, %v358
        %364 = vst [vmem:[#allocation2] sm:$0xff] %v363
        // Predicated region
        $region45: #{tpu_custom_call.1} parent=31 // pred_check
          %p365 = pneg %p252
        $region46: #{tpu_custom_call.1} parent=31 // pred_check_branch
          %367 = sbr.rel (%p365) target = $region48
        $region47: #{tpu_custom_call.1} parent=31 // pred_region
          %v368 = vld [vmem:[#allocation2] sm:$0xff]
          %v369 = vld [vmem:[%s250] sm:$0x1]
          %v371 = vlaneseq
          %v372 = vshrl.u32 %v371, 7
          %v373 = vsub.s32 0, %v372
          %v374 = vrot.slane %v369, %v373
          %v376 = vadd.f32 %v368, %v374
          %377 = vst [vmem:[%s246] sm:$0xff] %v376
        $region48: #{tpu_custom_call.1} parent=31 // pred_fallthru
          _
        %s378 = sand.u32 %s132, 1
        %s379 = scalar_lea.sflag [#allocation5], %s378
        %s380 = sand.u32 %s132, 1
        %s381 = smul.addr %s380, 8
        %s382 = scalar_lea.vmem [#allocation8], %s381
        // Predicated region
        $region49: #{tpu_custom_call.1} parent=31 // pred_check
          %p383 = pneg %p142
        $region50: #{tpu_custom_call.1} parent=31 // pred_check_branch
          %385 = sbr.rel (%p383) target = $region52
        $region51: #{tpu_custom_call.1} parent=31 // pred_region
          %s387 = ssub.s32 128, 128
          %388 = vsyncadd %s379, %s387
          %s389 = sadd.s32 %s27, %s26
          %s390 = smul.addr %s389, 128
          %s391 = scalar_lea.hbm %s3, %s390
          %s393 = sshll.u32 %s382, 4
          %s394 = int_to_ptr.vmem [resolvable:$true] %s393
          %396 = dma.vmem_to_hbm [thread:$0]  %s394, 128, %s391, %s379
        $region52: #{tpu_custom_call.1} parent=31 // pred_fallthru
          _
      $region32: #{tpu_custom_call.1} parent=5 // pred_fallthru
        _
      %p397 = scmp.le.s32.totalorder 2, %s16
      // Predicated region
      $region53: #{tpu_custom_call.1} parent=5 // pred_check
        %p398 = pneg %p397
      $region54: #{tpu_custom_call.1} parent=5 // pred_check_branch
        %400 = sbr.rel (%p398) target = $region56
      $region55: #{tpu_custom_call.1} parent=5 // pred_region
        %s401 = ssub.s32 %s16, 2
        // Predicated region
        $region57: #{tpu_custom_call.1} parent=55 // pred_check
          %p402 = pneg %p148
        $region58: #{tpu_custom_call.1} parent=55 // pred_check_branch
          %404 = sbr.rel (%p402) target = $region60
        $region59: #{tpu_custom_call.1} parent=55 // pred_region
          %s405 = sand.u32 %s133, 1
          %s406 = scalar_lea.sflag [#allocation5], %s405
          %s407 = sand.u32 %s133, 1
          %s408 = smul.addr %s407, 8
          %s409 = scalar_lea.vmem [#allocation8], %s408
          %410 = dma.done %s406, 128
        $region60: #{tpu_custom_call.1} parent=55 // pred_fallthru
          _
      $region56: #{tpu_custom_call.1} parent=5 // pred_fallthru
        _
    $region6: #{tpu_custom_call.1} parent=1 // loop_footer
      %s20 = sadd.s32 1, %s16
    $region7: #{tpu_custom_call.1} parent=1 // loop_footer_branch
      %15 = sbr.rel target = $region3
    $region8: #{tpu_custom_call.1} parent=1 // loop_exit
      _
    %411 = vsyncpa [#allocation4], 1
    %s412 = scalar_lea.sflag [#allocation4], 1
    %413 = vsyncpa %s412, 1
    %414 = vsyncpa [#allocation7], 1
    %415 = vsyncpa [#allocation5], 1
    %s416 = scalar_lea.sflag [#allocation5], 1
    %417 = vsyncpa %s416, 1

</llo_original>
